<compile_context>
chip_gen: v6e
topology: v6e:2x2x1
jax: 0.10.0
libtpu: 0.0.40
codegen_flags: <defaults>
</compile_context>

<pallas_src>
import functools
import math

import jax
import jax.numpy as jnp
from jax.experimental import pallas as pl
from jax.experimental.pallas import tpu as pltpu

D_MODEL = 512          # matches the PyTorch spec
VOCAB = 1000
MAX_TOK_BLOCK = 128    # tokens gathered per grid step (multiple of 8)


def _embedding_kernel(ids_smem, table_hbm, out_ref, gather_buf, sem, *,
                      tok_block, scale):
    # ids_smem:   (N_pad,) int32, SMEM (scalar-prefetched token ids)
    # table_hbm:  (vocab, d_model), HBM (memory_space=pl.ANY)
    # out_ref:    (tok_block, d_model) VMEM output tile
    # gather_buf: (2, tok_block, d_model) VMEM double buffer the row DMAs land in
    # sem:        (2,) DMA semaphores, one per gather slot
    i = pl.program_id(0)
    nsteps = pl.num_programs(0)

    def issue_block(block_idx, slot):
        base = block_idx * tok_block

        @pl.loop(0, tok_block)
        def _issue(t):
            tok = ids_smem[base + t]                       # id in [0, vocab)
            pltpu.make_async_copy(
                table_hbm.at[pl.ds(tok, 1)],
                gather_buf.at[slot, pl.ds(t, 1)],
                sem.at[slot],
            ).start()

    # Prime the pipeline: block 0's gather is issued on the first step only.
    @pl.when(i == 0)
    def _prime():
        issue_block(0, 0)

    # Prefetch block i+1 into the other slot; it overlaps with this step's
    # drain + store and with the pipeline's output write-back.
    @pl.when(i + 1 < nsteps)
    def _prefetch():
        issue_block(i + 1, (i + 1) % 2)

    slot = i % 2

    # Drain block i: every row copy targeting this slot has the same size, so
    # waiting tok_block times on sem[slot] accounts for all of them.
    @pl.loop(0, tok_block)
    def _drain(t):
        pltpu.make_async_copy(
            table_hbm.at[pl.ds(0, 1)],
            gather_buf.at[slot, pl.ds(0, 1)],
            sem.at[slot],
        ).wait()

    out_ref[...] = (gather_buf[slot] * scale).astype(out_ref.dtype)


def embeddings_forward(ids, table, max_tok_block=MAX_TOK_BLOCK):
    """Pallas equivalent of Embeddings(d_model, vocab)(x) == lut(x) * sqrt(d_model)."""
    vocab, d_model = table.shape
    B, S = ids.shape
    N = B * S

    # Tokens per grid step: multiple of 8 (sublane), capped at max_tok_block.
    tok_block = min(max_tok_block, ((N + 7) // 8) * 8)
    n_pad = ((N + tok_block - 1) // tok_block) * tok_block

    ids_flat = ids.reshape(-1).astype(jnp.int32)
    if n_pad != N:
        ids_flat = jnp.pad(ids_flat, (0, n_pad - N))   # pad with id 0 (valid row)

    kernel = functools.partial(_embedding_kernel,
                               tok_block=tok_block,
                               scale=math.sqrt(d_model))

    out_flat = pl.pallas_call(
        kernel,
        out_shape=jax.ShapeDtypeStruct((n_pad, d_model), table.dtype),
        grid_spec=pltpu.PrefetchScalarGridSpec(
            num_scalar_prefetch=1,                        # ids -> SMEM
            grid=(n_pad // tok_block,),
            in_specs=[pl.BlockSpec(memory_space=pl.ANY)], # table stays in HBM
            out_specs=pl.BlockSpec((tok_block, d_model), lambda i, ids: (i, 0)),
            scratch_shapes=[
                pltpu.VMEM((2, tok_block, d_model), table.dtype),
                pltpu.SemaphoreType.DMA((2,)),
            ],
        ),
        compiler_params=pltpu.CompilerParams(
            # cross-step double buffering => grid must run sequentially
            dimension_semantics=("arbitrary",)),
    )(ids_flat, table)

    return out_flat[:N].reshape(B, S, d_model)


if __name__ == "__main__":
    key = jax.random.PRNGKey(0)
    k_tab, k_ids = jax.random.split(key)

    # nn.Embedding default init is N(0, 1) on the weight table.
    table = jax.random.normal(k_tab, (VOCAB, D_MODEL), dtype=jnp.float32)

    # Small input consistent with the module: batch=2, seq=8 token ids in [0, vocab).
    x = jax.random.randint(k_ids, (2, 8), 0, VOCAB, dtype=jnp.int32)

    out = jax.block_until_ready(embeddings_forward(x, table))

    # Reference check (plain JAX): lut(x) * sqrt(d_model)
    ref = table[x] * math.sqrt(D_MODEL)
    assert out.shape == (2, 8, D_MODEL)
    assert jnp.allclose(out, ref, atol=1e-5, rtol=1e-5)

    print("KERNEL_OK")
</pallas_src>

<mosaic_0001>
module attributes {stable_mosaic.version = 11 : i64} {
  func.func @_embedding_kernel(%arg0: i32, %arg1: memref<16xi32, #tpu.memory_space<smem>>, %arg2: memref<1000x512xf32, #tpu.memory_space<any>>, %arg3: memref<16x512xf32, #tpu.memory_space<vmem>>, %arg4: memref<2x16x512xf32, #tpu.memory_space<vmem>>, %arg5: memref<2x!tpu.dma_semaphore, #tpu.memory_space<semaphore_mem>>) attributes {dimension_semantics = [#tpu.dimension_semantics<arbitrary>], iteration_bounds = array<i64: 1>, scalar_prefetch = 1 : i64, scratch_operands = 2 : i64, tpu.core_type = #tpu.core_type<tc>, window_params = [{}, {transform_indices = @transform_1, window_bounds = array<i64: 16, 512>}]} {
    %c0_i32 = arith.constant 0 : i32
    %0 = arith.cmpi eq, %arg0, %c0_i32 : i32
    %1 = arith.extui %0 : i1 to i32
    %c0_i32_0 = arith.constant 0 : i32
    %2 = arith.cmpi ne, %1, %c0_i32_0 : i32
    scf.if %2 {
      %c0_i32_13 = arith.constant 0 : i32
      %c16_i32_14 = arith.constant 16 : i32
      %24 = arith.addi %c0_i32_13, %c16_i32_14 : i32
      %c1_i32_15 = arith.constant 1 : i32
      scf.for %arg6 = %c0_i32_13 to %24 step %c1_i32_15  : i32 {
        %c1_i32_17 = arith.constant 1 : i32
        %25 = arith.muli %arg6, %c1_i32_17 : i32
        %c0_i32_18 = arith.constant 0 : i32
        %26 = arith.addi %c0_i32_18, %25 : i32
        %c0_i32_19 = arith.constant 0 : i32
        %27 = arith.addi %c0_i32_19, %26 : i32
        %28 = arith.index_cast %27 : i32 to index
        %29 = memref.load %arg1[%28] : memref<16xi32, #tpu.memory_space<smem>>
        %c0_i32_20 = arith.constant 0 : i32
        %c0_i32_21 = arith.constant 0 : i32
        %c0_i32_22 = arith.constant 0 : i32
        %30 = tpu.memref_slice %arg2[%29, %c0_i32_22] : memref<1000x512xf32, #tpu.memory_space<any>> -> memref<1x512xf32, #tpu.memory_space<any>>
        %c0_i32_23 = arith.constant 0 : i32
        %31 = tpu.memref_slice %arg4[%c0_i32_20, %26, %c0_i32_23] : memref<2x16x512xf32, #tpu.memory_space<vmem>> -> memref<1x1x512xf32, #tpu.memory_space<vmem>>
        %32 = tpu.memref_squeeze %31 : memref<1x1x512xf32, #tpu.memory_space<vmem>> -> memref<1x512xf32, #tpu.memory_space<vmem>>
        %33 = tpu.memref_slice %arg5[%c0_i32_21] : memref<2x!tpu.dma_semaphore, #tpu.memory_space<semaphore_mem>> -> memref<1x!tpu.dma_semaphore, #tpu.memory_space<semaphore_mem>>
        %34 = tpu.memref_squeeze %33 : memref<1x!tpu.dma_semaphore, #tpu.memory_space<semaphore_mem>> -> memref<!tpu.dma_semaphore, #tpu.memory_space<semaphore_mem>>
        tpu.enqueue_dma source(%30 : memref<1x512xf32, #tpu.memory_space<any>>) target(%32 : memref<1x512xf32, #tpu.memory_space<vmem>>) target_semaphore(%34 : memref<!tpu.dma_semaphore, #tpu.memory_space<semaphore_mem>>)
      }
      %c16_i32_16 = arith.constant 16 : i32
    } else {
    }
    %c1_i32 = arith.constant 1 : i32
    %3 = arith.addi %arg0, %c1_i32 : i32
    %c1_i32_1 = arith.constant 1 : i32
    %4 = arith.cmpi slt, %3, %c1_i32_1 : i32
    %5 = arith.extui %4 : i1 to i32
    %c0_i32_2 = arith.constant 0 : i32
    %6 = arith.cmpi ne, %5, %c0_i32_2 : i32
    scf.if %6 {
      %c1_i32_13 = arith.constant 1 : i32
      %24 = arith.addi %arg0, %c1_i32_13 : i32
      %c1_i32_14 = arith.constant 1 : i32
      %25 = arith.addi %arg0, %c1_i32_14 : i32
      %c2_i32_15 = arith.constant 2 : i32
      %c0_i32_16 = arith.constant 0 : i32
      %26 = arith.cmpi eq, %c2_i32_15, %c0_i32_16 : i32
      %c1_i32_17 = arith.constant 1 : i32
      %27 = arith.select %26, %c1_i32_17, %c2_i32_15 : i32
      %28 = arith.remsi %25, %27 : i32
      %c0_i32_18 = arith.constant 0 : i32
      %29 = arith.cmpi ne, %28, %c0_i32_18 : i32
      %c0_i32_19 = arith.constant 0 : i32
      %30 = arith.cmpi slt, %28, %c0_i32_19 : i32
      %c0_i32_20 = arith.constant 0 : i32
      %31 = arith.cmpi slt, %27, %c0_i32_20 : i32
      %32 = arith.xori %30, %31 : i1
      %33 = arith.andi %32, %29 : i1
      %34 = arith.addi %28, %27 : i32
      %35 = arith.select %33, %34, %28 : i32
      %c16_i32_21 = arith.constant 16 : i32
      %36 = arith.muli %24, %c16_i32_21 : i32
      %c0_i32_22 = arith.constant 0 : i32
      %c16_i32_23 = arith.constant 16 : i32
      %37 = arith.addi %c0_i32_22, %c16_i32_23 : i32
      %c1_i32_24 = arith.constant 1 : i32
      scf.for %arg6 = %c0_i32_22 to %37 step %c1_i32_24  : i32 {
        %c1_i32_26 = arith.constant 1 : i32
        %38 = arith.muli %arg6, %c1_i32_26 : i32
        %c0_i32_27 = arith.constant 0 : i32
        %39 = arith.addi %c0_i32_27, %38 : i32
        %40 = arith.addi %36, %39 : i32
        %41 = arith.index_cast %40 : i32 to index
        %42 = memref.load %arg1[%41] : memref<16xi32, #tpu.memory_space<smem>>
        %c0_i32_28 = arith.constant 0 : i32
        %43 = tpu.memref_slice %arg2[%42, %c0_i32_28] : memref<1000x512xf32, #tpu.memory_space<any>> -> memref<1x512xf32, #tpu.memory_space<any>>
        %c0_i32_29 = arith.constant 0 : i32
        %44 = tpu.memref_slice %arg4[%35, %39, %c0_i32_29] : memref<2x16x512xf32, #tpu.memory_space<vmem>> -> memref<1x1x512xf32, #tpu.memory_space<vmem>>
        %45 = tpu.memref_squeeze %44 : memref<1x1x512xf32, #tpu.memory_space<vmem>> -> memref<1x512xf32, #tpu.memory_space<vmem>>
        %46 = tpu.memref_slice %arg5[%35] : memref<2x!tpu.dma_semaphore, #tpu.memory_space<semaphore_mem>> -> memref<1x!tpu.dma_semaphore, #tpu.memory_space<semaphore_mem>>
        %47 = tpu.memref_squeeze %46 : memref<1x!tpu.dma_semaphore, #tpu.memory_space<semaphore_mem>> -> memref<!tpu.dma_semaphore, #tpu.memory_space<semaphore_mem>>
        tpu.enqueue_dma source(%43 : memref<1x512xf32, #tpu.memory_space<any>>) target(%45 : memref<1x512xf32, #tpu.memory_space<vmem>>) target_semaphore(%47 : memref<!tpu.dma_semaphore, #tpu.memory_space<semaphore_mem>>)
      }
      %c16_i32_25 = arith.constant 16 : i32
    } else {
    }
    %c2_i32 = arith.constant 2 : i32
    %c0_i32_3 = arith.constant 0 : i32
    %7 = arith.cmpi eq, %c2_i32, %c0_i32_3 : i32
    %c1_i32_4 = arith.constant 1 : i32
    %8 = arith.select %7, %c1_i32_4, %c2_i32 : i32
    %9 = arith.remsi %arg0, %8 : i32
    %c0_i32_5 = arith.constant 0 : i32
    %10 = arith.cmpi ne, %9, %c0_i32_5 : i32
    %c0_i32_6 = arith.constant 0 : i32
    %11 = arith.cmpi slt, %9, %c0_i32_6 : i32
    %c0_i32_7 = arith.constant 0 : i32
    %12 = arith.cmpi slt, %8, %c0_i32_7 : i32
    %13 = arith.xori %11, %12 : i1
    %14 = arith.andi %13, %10 : i1
    %15 = arith.addi %9, %8 : i32
    %16 = arith.select %14, %15, %9 : i32
    %c0_i32_8 = arith.constant 0 : i32
    %c16_i32 = arith.constant 16 : i32
    %17 = arith.addi %c0_i32_8, %c16_i32 : i32
    %c1_i32_9 = arith.constant 1 : i32
    scf.for %arg6 = %c0_i32_8 to %17 step %c1_i32_9  : i32 {
      %c0_i32_13 = arith.constant 0 : i32
      %c0_i32_14 = arith.constant 0 : i32
      %24 = tpu.memref_slice %arg2[%c0_i32_13, %c0_i32_14] : memref<1000x512xf32, #tpu.memory_space<any>> -> memref<1x512xf32, #tpu.memory_space<any>>
      %c0_i32_15 = arith.constant 0 : i32
      %c0_i32_16 = arith.constant 0 : i32
      %25 = tpu.memref_slice %arg4[%16, %c0_i32_15, %c0_i32_16] : memref<2x16x512xf32, #tpu.memory_space<vmem>> -> memref<1x1x512xf32, #tpu.memory_space<vmem>>
      %26 = tpu.memref_squeeze %25 : memref<1x1x512xf32, #tpu.memory_space<vmem>> -> memref<1x512xf32, #tpu.memory_space<vmem>>
      %27 = tpu.memref_slice %arg5[%16] : memref<2x!tpu.dma_semaphore, #tpu.memory_space<semaphore_mem>> -> memref<1x!tpu.dma_semaphore, #tpu.memory_space<semaphore_mem>>
      %28 = tpu.memref_squeeze %27 : memref<1x!tpu.dma_semaphore, #tpu.memory_space<semaphore_mem>> -> memref<!tpu.dma_semaphore, #tpu.memory_space<semaphore_mem>>
      tpu.wait_dma2 semaphore(%28 : memref<!tpu.dma_semaphore, #tpu.memory_space<semaphore_mem>>) src(%24 : memref<1x512xf32, #tpu.memory_space<any>>) dst(%26 : memref<1x512xf32, #tpu.memory_space<vmem>>)
    }
    %18 = arith.index_cast %16 : i32 to index
    %c0 = arith.constant 0 : index
    %c0_10 = arith.constant 0 : index
    %19 = vector.load %arg4[%18, %c0, %c0_10] : memref<2x16x512xf32, #tpu.memory_space<vmem>>, vector<1x16x512xf32>
    %20 = vector.shape_cast %19 : vector<1x16x512xf32> to vector<16x512xf32>
    %cst = arith.constant 22.6274166 : f32
    %21 = vector.broadcast %cst : f32 to vector<16x512xf32>
    %22 = arith.mulf %20, %21 : vector<16x512xf32>
    %c0_11 = arith.constant 0 : index
    %c0_12 = arith.constant 0 : index
    %23 = vector.load %arg3[%c0_11, %c0_12] : memref<16x512xf32, #tpu.memory_space<vmem>>, vector<16x512xf32>
    tpu.vector_store %arg3[%c0_11, %c0_12], %22 {strides = array<i32>} : memref<16x512xf32, #tpu.memory_space<vmem>>, vector<16x512xf32>,
    return
  }
  func.func @transform_1(%arg0: i32, %arg1: memref<16xi32, #tpu.memory_space<smem>>) -> (i32, i32) {
    %c0_i32 = arith.constant 0 : i32
    %c0_i32_0 = arith.constant 0 : i32
    return %arg0, %c0_i32 : i32, i32
  }
}

</mosaic_0001>

<llo_original>
// kernel: tpu_custom_call.1
$region0: #{tpu_custom_call.1}
  #allocation0 [shape = 'u32[]', space=smem, size = 0x4, offset = 0x4, fixed_abs, tag = 'smem constant byte address 0x4 - core index']
  #allocation1 [shape = 'u32[144,128]{1,0:T(1,128)}', space=vmem, size = 0x12000, scoped, tag = 'internal scratch']
  #allocation2 [shape = 'f32[2,16,512]{2,1,0:T(8,128)}', space=vmem, size = 0x10000, scoped, tag = 'scratch operand']
  #allocation3 [shape = 's32[2]{0}', space=sflag, size = 0x8, scoped, tag = 'scratch operand']
  #allocation4 [shape = 's32[1]{0}', space=sflag, size = 0x4, scoped, tag = 'scoped memory for tpu_custom_call.1']
  #allocation5 [shape = 'u8[512]{0}', space=smem, size = 0x200, scoped, tag = 'prefetched SMEM operand 0']
  #allocation8 [shape = 's32[]', space=sflag, size = 0x4, offset = 0, fixed_abs, tag = 'sflag constant byte address 0x0 - dummy sync flag']
  #allocation9 [shape = 's32[]', space=sflag, size = 0x4, offset = 0, fixed_abs, tag = 'sflag constant byte address 0x0 - dummy sync flag']
  %s0 = inlined_call_operand.hbm [shape: s32[16], index: 0, kind: input, shape index: {}]
  %s1 = inlined_call_operand.hbm [shape: f32[1000,512], index: 1, kind: input, shape index: {}]
  %s2 = inlined_call_operand.hbm [shape: f32[16,512], index: 2, kind: output, shape index: {}]
  %s3 = sld [smem:[#allocation0]]
  $region39: #{tpu_custom_call.1} parent=0
    _
  %s5 = ssub.s32 1, %s3
  %s6 = scalar_select 0, %s5, %s3
  %8 = dma.hbm_to_smem %s0, 16, [#allocation5], [#allocation4]
  %9 = dma.done [#allocation4], 16
  %10 = sfence
  $region1: #{tpu_custom_call.1} parent=0
    #allocation6 [shape = 'u8[32768]{0}', space=vmem, size = 0x8000, scoped, tag = 'output window, operand 0, single buffered']
    #allocation7 [shape = 's32[1]{0}', space=sflag, size = 0x4, scoped, tag = 'scoped memory for tpu_custom_call.1']
    %11 = vsyncpa [#allocation7], 0
    %p12 = scmp.eq.s32.totalorder 0, 0
    // Predicated region
    $region2: #{tpu_custom_call.1} parent=1 // pred_check
      %p13 = pneg %p12
    $region3: #{tpu_custom_call.1} parent=1 // pred_check_branch
      %15 = sbr.rel (%p13) target = $region5
    $region4: #{tpu_custom_call.1} parent=1 // pred_region
      loop: start=0, step=1, limit=16
      $region6: #{tpu_custom_call.1} parent=4 // loop_pre_header
        _
      $region7: #{tpu_custom_call.1} parent=4 // loop_header
        %s17 = sphi 0, %s21
        %p18 = scmp.ge.s32.totalorder %s17, 16
      $region8: #{tpu_custom_call.1} parent=4 // loop_header_branch
        %20 = sbr.rel (%p18) target = $region12
      $region9: #{tpu_custom_call.1} parent=4 // loop_body
        %s22 = sld [smem:[#allocation5 + %s17]]
        %s23 = sshrl.u32 %s22, 3
        %s24 = sand.u32 %s22, 7
        %s25 = smul.u32 %s23, 32
        %s26 = sadd.s32 %s24, %s25
        %s27 = smul.addr %s26, 16
        %s28 = scalar_lea.hbm %s1, %s27
        %s29 = sshrl.u32 %s17, 3
        %s30 = sand.u32 %s17, 7
        %s31 = smul.u32 %s29, 32
        %s32 = sadd.s32 %s30, %s31
        %s33 = scalar_lea.vmem [#allocation2], %s32
        %s35 = sshll.u32 %s33, 4
        %s36 = int_to_ptr.vmem [resolvable:$true] %s35
        %38 = dma.hbm_to_vmem [thread:$0]  %s28, 64, %s36, [#allocation3], 128, 128, 1
      $region10: #{tpu_custom_call.1} parent=4 // loop_footer
        %s21 = sadd.s32 1, %s17
      $region11: #{tpu_custom_call.1} parent=4 // loop_footer_branch
        %16 = sbr.rel target = $region7
      $region12: #{tpu_custom_call.1} parent=4 // loop_exit
        _
    $region5: #{tpu_custom_call.1} parent=1 // pred_fallthru
      _
    %s39 = sadd.s32 0, 1
    %p40 = scmp.lt.s32.totalorder %s39, 1
    // Predicated region
    $region13: #{tpu_custom_call.1} parent=1 // pred_check
      %p41 = pneg %p40
    $region14: #{tpu_custom_call.1} parent=1 // pred_check_branch
      %43 = sbr.rel (%p41) target = $region16
    $region15: #{tpu_custom_call.1} parent=1 // pred_region
      %p44 = scmp.lt.s32.totalorder %s39, 0
      %s45 = ssub.s32 0, %s39
      %s46 = scalar_select %p44, %s45, %s39
      %s47 = sand.u32 %s46, 1
      %s48 = ssub.s32 0, %s47
      %s49 = scalar_select %p44, %s48, %s47
      %p50 = scmp.ne.s32.totalorder %s49, 0
      %p51 = scmp.lt.s32.totalorder %s49, 0
      %p52 = pnand %p51, %p50
      %p53 = pneg %p52
      %s54 = sadd.s32 %s49, 2
      %s55 = scalar_select %p53, %s54, %s49
      %s56 = smul.u32 %s39, 16
      loop: start=0, step=1, limit=16
      $region17: #{tpu_custom_call.1} parent=15 // loop_pre_header
        _
      $region18: #{tpu_custom_call.1} parent=15 // loop_header
        %s58 = sphi 0, %s62
        %p59 = scmp.ge.s32.totalorder %s58, 16
      $region19: #{tpu_custom_call.1} parent=15 // loop_header_branch
        %61 = sbr.rel (%p59) target = $region23
      $region20: #{tpu_custom_call.1} parent=15 // loop_body
        %s63 = sadd.s32 %s56, %s58
        %s64 = sld [smem:[#allocation5 + %s63]]
        %s65 = sshrl.u32 %s64, 3
        %s66 = sand.u32 %s64, 7
        %s67 = smul.u32 %s65, 32
        %s68 = sadd.s32 %s66, %s67
        %s69 = smul.addr %s68, 16
        %s70 = scalar_lea.hbm %s1, %s69
        %s71 = sshrl.u32 %s58, 3
        %s72 = sand.u32 %s58, 7
        %s73 = smul.u32 %s71, 32
        %s74 = sadd.s32 %s72, %s73
        %s75 = smul.u32 %s55, 64
        %s76 = sadd.s32 %s74, %s75
        %s77 = scalar_lea.vmem [#allocation2], %s76
        %s78 = scalar_lea.sflag [#allocation3], %s55
        %s80 = sshll.u32 %s77, 4
        %s81 = int_to_ptr.vmem [resolvable:$true] %s80
        %83 = dma.hbm_to_vmem [thread:$0]  %s70, 64, %s81, %s78, 128, 128, 1
      $region21: #{tpu_custom_call.1} parent=15 // loop_footer
        %s62 = sadd.s32 1, %s58
      $region22: #{tpu_custom_call.1} parent=15 // loop_footer_branch
        %57 = sbr.rel target = $region18
      $region23: #{tpu_custom_call.1} parent=15 // loop_exit
        _
    $region16: #{tpu_custom_call.1} parent=1 // pred_fallthru
      _
    %s84 = ssub.s32 0, 0
    %s85 = ssub.s32 0, 0
    %p86 = scmp.ne.s32.totalorder 0, 0
    %p87 = scmp.lt.s32.totalorder 0, 0
    %p88 = pnand %p87, %p86
    %p89 = pneg %p88
    %s90 = sadd.s32 0, 2
    %s91 = scalar_select %p89, %s90, 0
    loop: start=0, step=1, limit=16
    $region24: #{tpu_custom_call.1} parent=1 // loop_pre_header
      _
    $region25: #{tpu_custom_call.1} parent=1 // loop_header
      %s93 = sphi 0, %s97
      %p94 = scmp.ge.s32.totalorder %s93, 16
    $region26: #{tpu_custom_call.1} parent=1 // loop_header_branch
      %96 = sbr.rel (%p94) target = $region30
    $region27: #{tpu_custom_call.1} parent=1 // loop_body
      %s98 = scalar_lea.sflag [#allocation3], %s91
      %s99 = smul.u32 1, 4
      %s100 = sshll.u32 %s99, 4
      %101 = dma.done %s98, %s100
    $region28: #{tpu_custom_call.1} parent=1 // loop_footer
      %s97 = sadd.s32 1, %s93
    $region29: #{tpu_custom_call.1} parent=1 // loop_footer_branch
      %92 = sbr.rel target = $region25
    $region30: #{tpu_custom_call.1} parent=1 // loop_exit
      _
    %s102 = smul.u32 %s91, 8
    %s103 = smul.addr %s102, 8
    %s104 = scalar_lea.vmem [#allocation2], %s103
    %v105 = vld [vmem:[%s104] sm:$0xff]
    %v106 = vld [vmem:[%s104 + $0x8] sm:$0xff]
    %v107 = vld [vmem:[%s104 + $0x10] sm:$0xff]
    %v108 = vld [vmem:[%s104 + $0x18] sm:$0xff]
    %v109 = vld [vmem:[%s104 + $0x20] sm:$0xff]
    %v110 = vld [vmem:[%s104 + $0x28] sm:$0xff]
    %v111 = vld [vmem:[%s104 + $0x30] sm:$0xff]
    %v112 = vld [vmem:[%s104 + $0x38] sm:$0xff]
    %v113 = vmul.f32 %v105, 22.627417
    %v114 = vmul.f32 %v106, 22.627417
    %v115 = vmul.f32 %v107, 22.627417
    %v116 = vmul.f32 %v108, 22.627417
    %v117 = vmul.f32 %v109, 22.627417
    %v118 = vmul.f32 %v110, 22.627417
    %v119 = vmul.f32 %v111, 22.627417
    %v120 = vmul.f32 %v112, 22.627417
    %121 = vst [vmem:[#allocation6] sm:$0xff] %v113
    %122 = vst [vmem:[#allocation6 + $0x8] sm:$0xff] %v114
    %123 = vst [vmem:[#allocation6 + $0x10] sm:$0xff] %v115
    %124 = vst [vmem:[#allocation6 + $0x18] sm:$0xff] %v116
    %125 = vst [vmem:[#allocation6 + $0x20] sm:$0xff] %v117
    %126 = vst [vmem:[#allocation6 + $0x28] sm:$0xff] %v118
    %127 = vst [vmem:[#allocation6 + $0x30] sm:$0xff] %v119
    %128 = vst [vmem:[#allocation6 + $0x38] sm:$0xff] %v120
    // Predicated region
    $region31: #{tpu_custom_call.1} parent=1 // pred_check
      _
    $region32: #{tpu_custom_call.1} parent=1 // pred_check_branch
      %130 = sbr.rel (0) target = $region34
    $region33: #{tpu_custom_call.1} parent=1 // pred_region
      %s132 = ssub.s32 1024, 1024
      %133 = vsyncadd [#allocation7], %s132
      %s134 = sshll.u32 [#allocation6], 4
      %s135 = int_to_ptr.vmem [resolvable:$true] %s134
      %140 = dma.vmem_to_hbm [thread:$0]  %s135, 1024, %s2, [#allocation7], 512, 512, 32
    $region34: #{tpu_custom_call.1} parent=1 // pred_fallthru
      _
    // Predicated region
    $region35: #{tpu_custom_call.1} parent=1 // pred_check
      _
    $region36: #{tpu_custom_call.1} parent=1 // pred_check_branch
      %142 = sbr.rel (0) target = $region38
    $region37: #{tpu_custom_call.1} parent=1 // pred_region
      %143 = dma.done [#allocation7], 1024
    $region38: #{tpu_custom_call.1} parent=1 // pred_fallthru
      _
    %144 = vsyncpa [#allocation7], 1
  %145 = vsyncmov [#allocation3]
  %s146 = vpop.sfrf %145
  %p147 = scmp.eq.s32.totalorder %s146, 0
  %p148 = pneg %p147
  %150 = shalt.err (%p148)
  %s151 = scalar_lea.sflag [#allocation3], 1
  %152 = vsyncmov %s151
  %s153 = vpop.sfrf %152
  %p154 = scmp.eq.s32.totalorder %s153, 0
  %p155 = pneg %p154
  %157 = shalt.err (%p155)

</llo_original>
